<compile_context>
chip_gen: v5e
topology: v5e:2x2
jax: 0.10.0
libtpu: 0.0.40
codegen_flags: <defaults>
</compile_context>

<pallas_src>
import jax
import jax.numpy as jnp
from jax.experimental import pallas as pl
from jax.experimental.pallas import tpu as pltpu

hidden_size = 200
_LANE = 128
_SUBLANE = 8
_SMALL_BATCH_CUTOFF = 256   # single-shot (no-grid) path only at/below this many rows
_MIN_GRID_STEPS = 4         # >= 2 grid steps per TensorCore after v7x megacore split


def mlp_kernel(x_ref, w1_ref, b1_ref, w2_ref, b2_ref, o_ref):
    # In-kernel bf16 cast of the x tile (rides in otherwise-idle VALU slots; a
    # wrapper-side cast would be a separate XLA pass over x in HBM). Accumulation
    # stays f32 via preferred_element_type.
    x = x_ref[...].astype(jnp.bfloat16)
    # h = relu(x @ W1 + b1)   (bias/ReLU in f32 on the VPU)
    h = jnp.dot(x, w1_ref[...], preferred_element_type=jnp.float32)
    h = jnp.maximum(h + b1_ref[...], 0.0)           # b1 is (1, Hp) -> broadcasts over batch
    # y = h @ W2 + b2
    y = jnp.dot(h.astype(w2_ref.dtype), w2_ref[...], preferred_element_type=jnp.float32)
    # NOTE: out_f = 4 lanes -> masked vst. Measure-first item: only switch to a
    # lane-dense transposed (out_f, batch) layout if stores show on the critical path.
    # Do NOT pad out_f to 128 (would multiply output HBM bytes 32x).
    o_ref[...] = (y + b2_ref[...]).astype(o_ref.dtype)


def prepare_params(w1, b1, w2, b2):
    """Pad hidden dim to a 128-lane multiple (200 -> 256) and store weights in bf16.

    Done once at init. Zero-padding is exact (relu(0)=0, padded W2 rows are zero);
    biases stay f32 since they are added after the f32-accumulated matmuls.
    """
    h = w1.shape[1]
    hp = ((h + _LANE - 1) // _LANE) * _LANE
    w1p = jnp.pad(w1, ((0, 0), (0, hp - h))).astype(jnp.bfloat16)
    b1p = jnp.pad(b1, ((0, 0), (0, hp - h)))                        # f32
    w2p = jnp.pad(w2, ((0, hp - h), (0, 0))).astype(jnp.bfloat16)
    return w1p, b1p, w2p, b2


def _round_up(x, m):
    return ((x + m - 1) // m) * m


def _choose_tile(batch, block_batch):
    # At least _MIN_GRID_STEPS grid steps (keeps both v7x TCs double-buffered),
    # capped at block_batch, rounded up to a sublane multiple.
    tb = min(block_batch, pl.cdiv(batch, _MIN_GRID_STEPS))
    return max(_SUBLANE, _round_up(tb, _SUBLANE))


def _vmem_limit_bytes(tb, in_f, hp, out_f):
    # Per-step footprint: the narrow (tb,in_f)/(tb,out_f) tiles are lane-padded to 128
    # lanes in VMEM and double-buffered; the h intermediate (+ its bf16 copy) lives once;
    # weights/biases are VMEM-resident but tiny.
    streamed = 2 * (tb * _LANE * 4) + 2 * (tb * _LANE * 4)
    interm = tb * hp * 4 + tb * hp * 2
    weights = in_f * hp * 2 + hp * 4 + hp * _LANE * 2 + _LANE * 4
    est = streamed + interm + weights + (1 << 20)          # +1 MiB slack
    # Never below the v6e/v7x scoped default (32 MiB), never above v7x physical headroom.
    return int(min(60 << 20, max(32 << 20, 1.5 * est)))


def net_forward(x, w1p, b1p, w2p, b2, *, block_batch=2048):
    """Pallas equivalent of Net.forward: relu(x @ W1.T + b1) @ W2.T + b2.

    w1p/b1p/w2p are the hidden-padded params from `prepare_params` (already in
    (in, out) layout, i.e. transposed relative to PyTorch's nn.Linear weights).
    Note: block_batch=2048 keeps the per-step VMEM footprint (~8 MiB) inside the
    v5e 16 MiB scoped default and well inside v6e/v7x; going to 4096+ is covered
    by the explicit vmem_limit_bytes below.
    """
    batch, in_f = x.shape
    hp = w1p.shape[1]
    out_f = w2p.shape[1]

    if batch <= _SMALL_BATCH_CUTOFF:
        # Genuinely small batch: single kernel invocation, everything VMEM-resident.
        # (Cutoff is decoupled from block_batch so medium batches still get a
        #  multi-step "parallel" grid and both v7x TensorCores.)
        return pl.pallas_call(
            mlp_kernel,
            out_shape=jax.ShapeDtypeStruct((batch, out_f), jnp.float32),
            in_specs=[pl.BlockSpec(memory_space=pltpu.MemorySpace.VMEM)] * 5,
            out_specs=pl.BlockSpec(memory_space=pltpu.MemorySpace.VMEM),
        )(x, w1p, b1p, w2p, b2)

    # Batch-tiled grid path. No wrapper-side pad/slice: grid = cdiv(batch, tb) and
    # Pallas clips the boundary block (garbage rows in the last input tile feed only
    # garbage output rows, which are never written past the real output extent).
    # Weights/biases use constant index_maps so they stay VMEM-resident across the
    # whole grid; only x and the output are streamed.
    tb = _choose_tile(batch, block_batch)
    grid = (pl.cdiv(batch, tb),)
    flops = 2 * batch * (in_f * hp + hp * out_f)
    bytes_accessed = batch * (in_f * 4 + out_f * 4) + (in_f * hp + hp * out_f) * 2

    return pl.pallas_call(
        mlp_kernel,
        out_shape=jax.ShapeDtypeStruct((batch, out_f), jnp.float32),
        grid_spec=pltpu.PrefetchScalarGridSpec(
            num_scalar_prefetch=0,
            grid=grid,
            in_specs=[
                pl.BlockSpec((tb, in_f), lambda b: (b, 0)),   # x: streamed per tile
                pl.BlockSpec((in_f, hp), lambda b: (0, 0)),   # W1: VMEM-resident
                pl.BlockSpec((1, hp), lambda b: (0, 0)),      # b1: VMEM-resident
                pl.BlockSpec((hp, out_f), lambda b: (0, 0)),  # W2: VMEM-resident
                pl.BlockSpec((1, out_f), lambda b: (0, 0)),   # b2: VMEM-resident
            ],
            out_specs=pl.BlockSpec((tb, out_f), lambda b: (b, 0)),
        ),
        compiler_params=pltpu.CompilerParams(
            dimension_semantics=("parallel",),                # v7x megacore split
            vmem_limit_bytes=_vmem_limit_bytes(tb, in_f, hp, out_f),
        ),
        cost_estimate=pl.CostEstimate(
            flops=flops, transcendentals=0, bytes_accessed=bytes_accessed),
    )(x, w1p, b1p, w2p, b2)
    # TODO(synk): if post-fix profiling shows x-side vld/DMA binding, pack x in HBM as
    # (batch/16, 128) lane-dense rows and unpack in-kernel (XLU relayout cost).


def init_linear_params(key, in_features, out_features):
    """Deterministic init mimicking torch.nn.Linear default (U[-1/sqrt(in), 1/sqrt(in)])."""
    kw, kb = jax.random.split(key)
    bound = 1.0 / jnp.sqrt(jnp.float32(in_features))
    # Stored directly in (in, out) layout (i.e. W.T relative to PyTorch).
    w = jax.random.uniform(kw, (in_features, out_features), jnp.float32, -bound, bound)
    b = jax.random.uniform(kb, (1, out_features), jnp.float32, -bound, bound)
    return w, b


if __name__ == "__main__":
    input_size = 8
    output_size = 4

    root = jax.random.PRNGKey(0)
    k_x1, k_x2, k_l1, k_l2 = jax.random.split(root, 4)

    w1, b1 = init_linear_params(k_l1, input_size, hidden_size)
    w2, b2 = init_linear_params(k_l2, hidden_size, output_size)
    params = prepare_params(w1, b1, w2, b2)

    def ref_fn(x):
        # Pure-JAX f32 reference of the unpadded forward semantics.
        return jnp.maximum(x @ w1 + b1, 0.0) @ w2 + b2

    # Small batch -> single-shot, whole-array-in-VMEM path.
    x_small = jax.random.normal(k_x1, (4, input_size), jnp.float32)
    out_small = net_forward(x_small, *params)
    jax.block_until_ready(out_small)
    assert out_small.shape == (4, output_size)
    # Tolerances loosened vs f32 reference because weights/x tiles go through bf16
    # on the MXU (accumulation stays f32).
    assert jnp.allclose(out_small, ref_fn(x_small), atol=2e-2, rtol=2e-2)

    # Medium batch, deliberately NOT a multiple of the tile -> batch-tiled grid path
    # with a clipped boundary block (exercises the no-pad / no-slice path).
    x_big = jax.random.normal(k_x2, (300, input_size), jnp.float32)
    out_big = net_forward(x_big, *params)
    jax.block_until_ready(out_big)
    assert out_big.shape == (300, output_size)
    assert jnp.allclose(out_big, ref_fn(x_big), atol=2e-2, rtol=2e-2)

    print("KERNEL_OK")
</pallas_src>

<mosaic_0001>
module attributes {stable_mosaic.version = 11 : i64} {
  func.func @mlp_kernel(%arg0: memref<4x8xf32, #tpu.memory_space<vmem>>, %arg1: memref<8x256xbf16, #tpu.memory_space<vmem>>, %arg2: memref<1x256xf32, #tpu.memory_space<vmem>>, %arg3: memref<256x4xbf16, #tpu.memory_space<vmem>>, %arg4: memref<1x4xf32, #tpu.memory_space<vmem>>, %arg5: memref<4x4xf32, #tpu.memory_space<vmem>>) attributes {dimension_semantics = [], scalar_prefetch = 0 : i64, scratch_operands = 0 : i64, tpu.core_type = #tpu.core_type<tc>} {
    %c0 = arith.constant 0 : index
    %c0_0 = arith.constant 0 : index
    %0 = vector.load %arg0[%c0, %c0_0] : memref<4x8xf32, #tpu.memory_space<vmem>>, vector<4x8xf32>
    %1 = arith.truncf %0 : vector<4x8xf32> to vector<4x8xbf16>
    %c0_1 = arith.constant 0 : index
    %c0_2 = arith.constant 0 : index
    %2 = vector.load %arg1[%c0_1, %c0_2] : memref<8x256xbf16, #tpu.memory_space<vmem>>, vector<8x256xbf16>
    %cst = arith.constant dense<0.000000e+00> : vector<4x256xf32>
    %3 = tpu.matmul %1, %2, %cst {dimension_numbers = #tpu.dot_dimension_numbers<[1], [0], [0], [1], [0, 0, 1, 1], [], []>} : vector<4x8xbf16>, vector<8x256xbf16>, vector<4x256xf32> -> vector<4x256xf32>
    %c0_3 = arith.constant 0 : index
    %c0_4 = arith.constant 0 : index
    %4 = vector.load %arg2[%c0_3, %c0_4] : memref<1x256xf32, #tpu.memory_space<vmem>>, vector<1x256xf32>
    %5 = vector.broadcast %4 : vector<1x256xf32> to vector<4x256xf32>
    %6 = arith.addf %3, %5 : vector<4x256xf32>
    %cst_5 = arith.constant 0.000000e+00 : f32
    %7 = vector.broadcast %cst_5 : f32 to vector<4x256xf32>
    %8 = arith.maximumf %6, %7 : vector<4x256xf32>
    %9 = arith.truncf %8 : vector<4x256xf32> to vector<4x256xbf16>
    %c0_6 = arith.constant 0 : index
    %c0_7 = arith.constant 0 : index
    %10 = vector.load %arg3[%c0_6, %c0_7] : memref<256x4xbf16, #tpu.memory_space<vmem>>, vector<256x4xbf16>
    %cst_8 = arith.constant dense<0.000000e+00> : vector<4x4xf32>
    %11 = tpu.matmul %9, %10, %cst_8 {dimension_numbers = #tpu.dot_dimension_numbers<[1], [0], [0], [1], [0, 0, 1, 1], [], []>} : vector<4x256xbf16>, vector<256x4xbf16>, vector<4x4xf32> -> vector<4x4xf32>
    %c0_9 = arith.constant 0 : index
    %c0_10 = arith.constant 0 : index
    %12 = vector.load %arg4[%c0_9, %c0_10] : memref<1x4xf32, #tpu.memory_space<vmem>>, vector<1x4xf32>
    %13 = vector.broadcast %12 : vector<1x4xf32> to vector<4x4xf32>
    %14 = arith.addf %11, %13 : vector<4x4xf32>
    %c0_11 = arith.constant 0 : index
    %c0_12 = arith.constant 0 : index
    %15 = vector.load %arg5[%c0_11, %c0_12] : memref<4x4xf32, #tpu.memory_space<vmem>>, vector<4x4xf32>
    tpu.vector_store %arg5[%c0_11, %c0_12], %14 {strides = array<i32>} : memref<4x4xf32, #tpu.memory_space<vmem>>, vector<4x4xf32>,
    return
  }
}

</mosaic_0001>

<llo_original>
// kernel: tpu_custom_call.1
$region0: #{tpu_custom_call.1}
  #allocation0 [shape = 'u32[]', space=smem, size = 0x4, offset = 0x4, fixed_abs, tag = 'smem constant byte address 0x4 - core index']
  #allocation1 [shape = 'u32[72,128]{1,0:T(1,128)}', space=vmem, size = 0x9000, scoped, tag = 'internal scratch']
  %s0 = inlined_call_operand.vmem [shape: f32[4,8], index: 0, kind: input, shape index: {}]
  %s1 = inlined_call_operand.vmem [shape: bf16[8,256], index: 1, kind: input, shape index: {}]
  %s2 = inlined_call_operand.vmem [shape: f32[1,256], index: 2, kind: input, shape index: {}]
  %s3 = inlined_call_operand.vmem [shape: bf16[256,4], index: 3, kind: input, shape index: {}]
  %s4 = inlined_call_operand.vmem [shape: f32[1,4], index: 4, kind: input, shape index: {}]
  %s5 = inlined_call_operand.hbm [shape: f32[4,4], index: 5, kind: output, shape index: {}]
  %s6 = sld [smem:[#allocation0]]
  $region30: #{tpu_custom_call.1} parent=0
    _
  %s8 = ssub.s32 1, %s6
  %s9 = scalar_select 0, %s8, %s6
  $region1: #{tpu_custom_call.1} parent=0
    #allocation2 [shape = 'u8[2048]{0}', space=vmem, size = 0x800, scoped, tag = 'output window, operand 0, single buffered']
    #allocation3 [shape = 's32[1]{0}', space=sflag, size = 0x4, scoped, tag = 'scoped memory for tpu_custom_call.1']
    %10 = vsyncpa [#allocation3], 0
    // Predicated region
    $region2: #{tpu_custom_call.1} parent=1 // pred_check
      _
    $region3: #{tpu_custom_call.1} parent=1 // pred_check_branch
      %12 = sbr.rel (0) target = $region5
    $region4: #{tpu_custom_call.1} parent=1 // pred_region
      _
    $region5: #{tpu_custom_call.1} parent=1 // pred_fallthru
      _
    // Predicated region
    $region6: #{tpu_custom_call.1} parent=1 // pred_check
      _
    $region7: #{tpu_custom_call.1} parent=1 // pred_check_branch
      %14 = sbr.rel (0) target = $region9
    $region8: #{tpu_custom_call.1} parent=1 // pred_region
      _
    $region9: #{tpu_custom_call.1} parent=1 // pred_fallthru
      _
    // Predicated region
    $region10: #{tpu_custom_call.1} parent=1 // pred_check
      _
    $region11: #{tpu_custom_call.1} parent=1 // pred_check_branch
      %16 = sbr.rel (0) target = $region13
    $region12: #{tpu_custom_call.1} parent=1 // pred_region
      _
    $region13: #{tpu_custom_call.1} parent=1 // pred_fallthru
      _
    // Predicated region
    $region14: #{tpu_custom_call.1} parent=1 // pred_check
      _
    $region15: #{tpu_custom_call.1} parent=1 // pred_check_branch
      %18 = sbr.rel (0) target = $region17
    $region16: #{tpu_custom_call.1} parent=1 // pred_region
      _
    $region17: #{tpu_custom_call.1} parent=1 // pred_fallthru
      _
    // Predicated region
    $region18: #{tpu_custom_call.1} parent=1 // pred_check
      _
    $region19: #{tpu_custom_call.1} parent=1 // pred_check_branch
      %20 = sbr.rel (0) target = $region21
    $region20: #{tpu_custom_call.1} parent=1 // pred_region
      _
    $region21: #{tpu_custom_call.1} parent=1 // pred_fallthru
      _
    %v22 = vld [vmem:[%s0] sm:$0xf]
    %v23 = vpack.c.bf16 %v22, %v22
    %v24 = vld [vmem:[%s1] sm:$0xff]
    %v25 = vld [vmem:[%s2] sm:$0x3]
    %v27 = vperm.slane %v25, 0
    %v28 = vperm.slane %v25, 1
    %v32 = vunpack.c.l.b16 %v24
    %v33 = vunpack.c.h.b16 %v24
    %v34 = vpack.c.b16 %v32, %v32
    %v35 = vpack.c.b16 %v33, %v33
    %vm36 = vcmask 64512
    %v38 = vsel %vm36, %v23, 0
    %vm40 = vcmask 1043456
    %v42 = vsel %vm40, %v34, 0
    %v45 = vsel %vm40, %v35, 0
    %47 = vmatpush.bf16.msra.mxu0 0
    %48 = vmatpush.bf16.msra.mxu0 0
    %49 = vmatpush.bf16.msra.mxu0 0
    %50 = vmatpush.bf16.msra.mxu0 0
    %51 = vmatpush.bf16.msra.mxu0 0
    %52 = vmatpush.bf16.msra.mxu0 0
    %53 = vmatpush.bf16.msra.mxu0 0
    %54 = vmatpush.bf16.msra.mxu0 %v42
    %55 = vmatmul.bf16.gmra.mxu0 %v38
    %v56 = vpop.f32.mrf.mxu0
    %v57 = vadd.f32 %v27, %v56
    %v58 = vpop.f32.mrf.mxu0
    %59 = vdwg.mxu0
    %60 = vmatpush.bf16.msra.mxu0 0
    %61 = vmatpush.bf16.msra.mxu0 0
    %62 = vmatpush.bf16.msra.mxu0 0
    %63 = vmatpush.bf16.msra.mxu0 0
    %64 = vmatpush.bf16.msra.mxu0 0
    %65 = vmatpush.bf16.msra.mxu0 0
    %66 = vmatpush.bf16.msra.mxu0 0
    %67 = vmatpush.bf16.msra.mxu0 %v45
    %68 = vmatmul.bf16.gmra.mxu0 %v38
    %v69 = vpop.f32.mrf.mxu0
    %v70 = vadd.f32 %v28, %v69
    %v71 = vpop.f32.mrf.mxu0
    %72 = vdwg.mxu0
    %v73 = vmax.f32 %v57, 0.0
    %v74 = vmax.f32 %v70, 0.0
    %v75 = vpack.c.bf16 %v73, %v73
    %v76 = vpack.c.bf16 %v74, %v74
    %v77 = vld [vmem:[%s3] sm:$0xf]
    %v78 = vld [vmem:[%s3 + $0x4] sm:$0xf]
    %v79 = vld [vmem:[%s3 + $0x8] sm:$0xf]
    %v80 = vld [vmem:[%s3 + $0xc] sm:$0xf]
    %v81 = vld [vmem:[%s3 + $0x10] sm:$0xf]
    %v82 = vld [vmem:[%s3 + $0x14] sm:$0xf]
    %v83 = vld [vmem:[%s3 + $0x18] sm:$0xf]
    %v84 = vld [vmem:[%s3 + $0x1c] sm:$0xf]
    %v85 = vld [vmem:[%s3 + $0x20] sm:$0xf]
    %v86 = vld [vmem:[%s3 + $0x24] sm:$0xf]
    %v87 = vld [vmem:[%s3 + $0x28] sm:$0xf]
    %v88 = vld [vmem:[%s3 + $0x2c] sm:$0xf]
    %v89 = vld [vmem:[%s3 + $0x30] sm:$0xf]
    %v90 = vld [vmem:[%s3 + $0x34] sm:$0xf]
    %v91 = vld [vmem:[%s3 + $0x38] sm:$0xf]
    %v92 = vld [vmem:[%s3 + $0x3c] sm:$0xf]
    %v93 = vld [vmem:[%s3 + $0x40] sm:$0xf]
    %v94 = vld [vmem:[%s3 + $0x44] sm:$0xf]
    %v95 = vld [vmem:[%s3 + $0x48] sm:$0xf]
    %v96 = vld [vmem:[%s3 + $0x4c] sm:$0xf]
    %v97 = vld [vmem:[%s3 + $0x50] sm:$0xf]
    %v98 = vld [vmem:[%s3 + $0x54] sm:$0xf]
    %v99 = vld [vmem:[%s3 + $0x58] sm:$0xf]
    %v100 = vld [vmem:[%s3 + $0x5c] sm:$0xf]
    %v101 = vld [vmem:[%s3 + $0x60] sm:$0xf]
    %v102 = vld [vmem:[%s3 + $0x64] sm:$0xf]
    %v103 = vld [vmem:[%s3 + $0x68] sm:$0xf]
    %v104 = vld [vmem:[%s3 + $0x6c] sm:$0xf]
    %v105 = vld [vmem:[%s3 + $0x70] sm:$0xf]
    %v106 = vld [vmem:[%s3 + $0x74] sm:$0xf]
    %v107 = vld [vmem:[%s3 + $0x78] sm:$0xf]
    %v108 = vld [vmem:[%s3 + $0x7c] sm:$0xf]
    %v109 = vld [vmem:[%s4] sm:$0x1]
    %v111 = vperm.slane %v109, 0
    %v145 = vunpack.c.l.b16 %v77
    %v146 = vunpack.c.l.b16 %v78
    %v147 = vunpack.c.l.b16 %v79
    %v148 = vunpack.c.l.b16 %v80
    %v149 = vunpack.c.l.b16 %v81
    %v150 = vunpack.c.l.b16 %v82
    %v151 = vunpack.c.l.b16 %v83
    %v152 = vunpack.c.l.b16 %v84
    %v153 = vunpack.c.l.b16 %v85
    %v154 = vunpack.c.l.b16 %v86
    %v155 = vunpack.c.l.b16 %v87
    %v156 = vunpack.c.l.b16 %v88
    %v157 = vunpack.c.l.b16 %v89
    %v158 = vunpack.c.l.b16 %v90
    %v159 = vunpack.c.l.b16 %v91
    %v160 = vunpack.c.l.b16 %v92
    %v161 = vunpack.c.l.b16 %v93
    %v162 = vunpack.c.l.b16 %v94
    %v163 = vunpack.c.l.b16 %v95
    %v164 = vunpack.c.l.b16 %v96
    %v165 = vunpack.c.l.b16 %v97
    %v166 = vunpack.c.l.b16 %v98
    %v167 = vunpack.c.l.b16 %v99
    %v168 = vunpack.c.l.b16 %v100
    %v169 = vunpack.c.l.b16 %v101
    %v170 = vunpack.c.l.b16 %v102
    %v171 = vunpack.c.l.b16 %v103
    %v172 = vunpack.c.l.b16 %v104
    %v173 = vunpack.c.l.b16 %v105
    %v174 = vunpack.c.l.b16 %v106
    %v175 = vunpack.c.l.b16 %v107
    %v176 = vunpack.c.l.b16 %v108
    %v177 = vpack.c.b16 %v146, %v145
    %v178 = vpack.c.b16 %v148, %v147
    %v179 = vpack.c.b16 %v150, %v149
    %v180 = vpack.c.b16 %v152, %v151
    %v181 = vpack.c.b16 %v154, %v153
    %v182 = vpack.c.b16 %v156, %v155
    %v183 = vpack.c.b16 %v158, %v157
    %v184 = vpack.c.b16 %v160, %v159
    %v185 = vpack.c.b16 %v162, %v161
    %v186 = vpack.c.b16 %v164, %v163
    %v187 = vpack.c.b16 %v166, %v165
    %v188 = vpack.c.b16 %v168, %v167
    %v189 = vpack.c.b16 %v170, %v169
    %v190 = vpack.c.b16 %v172, %v171
    %v191 = vpack.c.b16 %v174, %v173
    %v192 = vpack.c.b16 %v176, %v175
    %209 = vmatpush.bf16.msra.mxu0 %v184
    %210 = vmatpush.bf16.msra.mxu0 %v183
    %211 = vmatpush.bf16.msra.mxu0 %v182
    %212 = vmatpush.bf16.msra.mxu0 %v181
    %213 = vmatpush.bf16.msra.mxu0 %v180
    %214 = vmatpush.bf16.msra.mxu0 %v179
    %215 = vmatpush.bf16.msra.mxu0 %v178
    %216 = vmatpush.bf16.msra.mxu0 %v177
    %217 = vmatmul.bf16.gmra.mxu0 %v75
    %v218 = vpop.f32.mrf.mxu0
    %v219 = vadd.f32 %v111, %v218
    %v220 = vpop.f32.mrf.mxu0
    %221 = vdwg.mxu0
    %222 = vmatpush.bf16.msra.mxu0 %v192
    %223 = vmatpush.bf16.msra.mxu0 %v191
    %224 = vmatpush.bf16.msra.mxu0 %v190
    %225 = vmatpush.bf16.msra.mxu0 %v189
    %226 = vmatpush.bf16.msra.mxu0 %v188
    %227 = vmatpush.bf16.msra.mxu0 %v187
    %228 = vmatpush.bf16.msra.mxu0 %v186
    %229 = vmatpush.bf16.msra.mxu0 %v185
    %230 = vmatmul.bf16.gmra.mxu0 %v76
    %v231 = vpop.f32.mrf.mxu0
    %v232 = vadd.f32 %v219, %v231
    %v233 = vpop.f32.mrf.mxu0
    %234 = vdwg.mxu0
    %vm235 = vcmask 27648
    %236 = vst.msk [vmem:[#allocation2] sm:$0xf] %vm235, %v232
    // Predicated region
    $region22: #{tpu_custom_call.1} parent=1 // pred_check
      _
    $region23: #{tpu_custom_call.1} parent=1 // pred_check_branch
      %238 = sbr.rel (0) target = $region25
    $region24: #{tpu_custom_call.1} parent=1 // pred_region
      %240 = vsyncadd [#allocation3], 0
      %s242 = sshll.u32 [#allocation2], 4
      %s243 = int_to_ptr.vmem [resolvable:$true] %s242
      %s244 = sshll.u32 %s5, 4
      %s245 = int_to_ptr.hbm [resolvable:$true] %s244
      %247 = dma.vmem_to_hbm [thread:$0]  %s243, 64, %s245, [#allocation3]
    $region25: #{tpu_custom_call.1} parent=1 // pred_fallthru
      _
    // Predicated region
    $region26: #{tpu_custom_call.1} parent=1 // pred_check
      _
    $region27: #{tpu_custom_call.1} parent=1 // pred_check_branch
      %249 = sbr.rel (0) target = $region29
    $region28: #{tpu_custom_call.1} parent=1 // pred_region
      %251 = dma.done [#allocation3], 64
    $region29: #{tpu_custom_call.1} parent=1 // pred_fallthru
      _
    %252 = vsyncpa [#allocation3], 1

</llo_original>
